<compile_context>
chip_gen: v7x
topology: tpu7x:2x2x1
jax: 0.10.0
libtpu: 0.0.40
codegen_flags: <defaults>
</compile_context>

<pallas_src>
import jax
import jax.numpy as jnp
from jax.experimental import pallas as pl
from jax.experimental.pallas import tpu as pltpu


def _round_up(n, m):
    return ((n + m - 1) // m) * m


# --------------------------------------------------------------------------
# Host-side packing: one flat, lane-aligned bf16 parameter buffer.
# Params convention (as produced by init_params): weights pre-transposed to
# [in, out], biases [1, out]  (nn.Linear: y = x @ W.T + b  ->  x @ W_t + b).
# --------------------------------------------------------------------------
def pack_dann_params(p):
    in_dim, F = p["fw1"].shape
    C = p["lw1"].shape[1]
    CN = p["lw3"].shape[1]
    DN = p["dw3"].shape[1]

    in_dim_p = _round_up(in_dim, 16)                   # bf16 sublane packing = 16 rows
    F_p = _round_up(F, 128)
    C2_p = _round_up(2 * C, 128)
    O_p = _round_up(CN + DN, 128)
    R = _round_up(max(in_dim_p, F_p, C2_p), 16)        # bias row (sublane-group aligned)

    bf16 = jnp.bfloat16
    zc = lambda r, c: jnp.zeros((r, c), jnp.float32)

    # Fused head weights: stage-1 concat, stages 2/3 block-diagonal so the
    # label / domain paths stay independent while sharing one matmul each.
    wh1 = jnp.concatenate([p["lw1"], p["dw1"]], axis=1)                     # [F, 2C]
    bh1 = jnp.concatenate([p["lb1"], p["db1"]], axis=1)                     # [1, 2C]
    wh2 = jnp.block([[p["lw2"], zc(C, C)], [zc(C, C), p["dw2"]]])           # [2C, 2C]
    bh2 = jnp.concatenate([p["lb2"], p["db2"]], axis=1)                     # [1, 2C]
    wh3 = jnp.block([[p["lw3"], zc(C, DN)], [zc(C, CN), p["dw3"]]])         # [2C, CN+DN]
    bh3 = jnp.concatenate([p["lb3"], p["db3"]], axis=1)                     # [1, CN+DN]

    blocks = [  # (weight, bias, padded column width)
        (p["fw1"], p["fb1"], F_p),
        (p["fw2"], p["fb2"], F_p),
        (wh1, bh1, C2_p),
        (wh2, bh2, C2_p),
        (wh3, bh3, O_p),
    ]
    total_cols = sum(w for _, _, w in blocks)
    # Zero-initialized buffer: all padded rows/cols stay exactly zero, which is
    # the invariant that makes the padded feat columns (sigmoid(0)=0.5)
    # contribute nothing downstream.
    wb = jnp.zeros((R + 16, total_cols), bf16)
    offsets = []
    col = 0
    for w, b, wpad in blocks:
        r, c = w.shape
        wb = wb.at[:r, col:col + c].set(w.astype(bf16))
        wb = wb.at[R:R + 1, col:col + c].set(b.astype(bf16))
        offsets.append(col)
        col += wpad

    dims = dict(in_dim=in_dim, in_dim_p=in_dim_p, F=F, C=C, CN=CN, DN=DN,
                F_p=F_p, C2_p=C2_p, O_p=O_p, R=R, offsets=tuple(offsets))
    return wb, dims


# --------------------------------------------------------------------------
# Pallas forward
# --------------------------------------------------------------------------
def dann_forward(x, wb, dims, *, block_b=512):
    B = x.shape[0]
    assert x.shape[1] == dims["in_dim"]
    in_dim_p = dims["in_dim_p"]
    F_p, C2_p, O_p = dims["F_p"], dims["C2_p"], dims["O_p"]
    R, CN, DN = dims["R"], dims["CN"], dims["DN"]
    o1, o2, o3, o4, o5 = dims["offsets"]

    # Pad the feature dim up to the packed in_dim (zeros contribute nothing).
    if x.shape[1] != in_dim_p:
        x = jnp.pad(x, ((0, 0), (0, in_dim_p - x.shape[1])))

    # Batch tiling: TB multiple of 16 (bf16 output tiles).  Cap TB so the grid
    # has >= 2 steps whenever the batch allows it (keeps both v7x TCs busy).
    half = _round_up(pl.cdiv(_round_up(B, 16), 2), 16)
    TB = max(16, min(block_b, half))
    B_pad = _round_up(B, TB)
    if B_pad != B:
        x = jnp.pad(x, ((0, B_pad - B), (0, 0)))
    nb = B_pad // TB

    def kernel(x_ref, wb_ref, out_ref):
        bf16 = jnp.bfloat16
        xb = x_ref[...].astype(bf16)                              # [TB, in_dim_p]

        def lin(a_bf16, row_hi, off, width):
            w = wb_ref[0:row_hi, off:off + width]                 # bf16 weights
            b = wb_ref[R:R + 1, off:off + width].astype(jnp.float32)
            return jnp.dot(a_bf16, w, preferred_element_type=jnp.float32) + b

        # ---- feature extractor: Linear -> Tanh -> Linear -> Sigmoid ----
        h = jnp.tanh(lin(xb, in_dim_p, o1, F_p))                  # f32 [TB, F_p]
        z = lin(h.astype(bf16), F_p, o2, F_p)
        feat = 0.5 * (jnp.tanh(0.5 * z) + 1.0)                    # sigmoid via 1 EUP tanh
        # Gradient reversal is identity in forward: domain head reads `feat`.

        # ---- fused heads: stage 1 concat, stages 2/3 block-diagonal ----
        h1 = jnp.tanh(lin(feat.astype(bf16), F_p, o3, C2_p))
        h2 = jnp.tanh(lin(h1.astype(bf16), C2_p, o4, C2_p))
        logits = lin(h2.astype(bf16), C2_p, o5, O_p)              # f32 [TB, O_p]

        # ---- fused masked log-softmaxes (single exp pass over the slab) ----
        col = jax.lax.broadcasted_iota(jnp.int32, (TB, O_p), 1)
        lab_m = col < CN
        dom_m = (col >= CN) & (col < CN + DN)
        valid = lab_m | dom_m

        m_lab = jnp.max(jnp.where(lab_m, logits, -1e30), axis=-1, keepdims=True)
        m_dom = jnp.max(jnp.where(dom_m, logits, -1e30), axis=-1, keepdims=True)
        m_sel = jnp.where(lab_m, m_lab, m_dom)                    # [TB, O_p]

        e = jnp.exp(jnp.where(valid, logits - m_sel, -1e30))      # one exp over 128 lanes
        s_lab = jnp.sum(jnp.where(lab_m, e, 0.0), axis=-1, keepdims=True)
        s_dom = jnp.sum(jnp.where(dom_m, e, 0.0), axis=-1, keepdims=True)
        log_s = jnp.where(lab_m, jnp.log(s_lab), jnp.log(s_dom))

        out = jnp.where(valid, logits - m_sel - log_s, 0.0)
        out_ref[...] = out.astype(out_ref.dtype)

    out = pl.pallas_call(
        kernel,
        out_shape=jax.ShapeDtypeStruct((B_pad, O_p), jnp.bfloat16),
        grid=(nb,),
        in_specs=[
            pl.BlockSpec((TB, in_dim_p), lambda i: (i, 0)),   # streamed batch tile
            pl.BlockSpec(wb.shape, lambda i: (0, 0)),         # packed params, VMEM-resident
        ],
        out_specs=pl.BlockSpec((TB, O_p), lambda i: (i, 0)),
        compiler_params=pltpu.CompilerParams(
            dimension_semantics=("parallel",)),               # megacore-shardable batch axis
    )(x, wb)

    label_pred = out[:B, :CN].astype(jnp.float32)
    domain_pred = out[:B, CN:CN + DN].astype(jnp.float32)
    return label_pred, domain_pred


# --------------------------------------------------------------------------
# Parameter init (weights stored pre-transposed [in, out]; biases [1, out])
# --------------------------------------------------------------------------
def init_params(key, in_dim, fea_hid_dim, cls_hid_dim, class_num, domain_num=2):
    def linear(k, din, dout):
        kw, kb = jax.random.split(k)
        bound = 1.0 / jnp.sqrt(din)
        w = jax.random.uniform(kw, (din, dout), jnp.float32, -bound, bound)
        b = jax.random.uniform(kb, (1, dout), jnp.float32, -bound, bound)
        return w, b

    keys = jax.random.split(key, 8)
    p = {}
    p["fw1"], p["fb1"] = linear(keys[0], in_dim, fea_hid_dim)
    p["fw2"], p["fb2"] = linear(keys[1], fea_hid_dim, fea_hid_dim)
    p["lw1"], p["lb1"] = linear(keys[2], fea_hid_dim, cls_hid_dim)
    p["lw2"], p["lb2"] = linear(keys[3], cls_hid_dim, cls_hid_dim)
    p["lw3"], p["lb3"] = linear(keys[4], cls_hid_dim, class_num)
    p["dw1"], p["db1"] = linear(keys[5], fea_hid_dim, cls_hid_dim)
    p["dw2"], p["db2"] = linear(keys[6], cls_hid_dim, cls_hid_dim)
    p["dw3"], p["db3"] = linear(keys[7], cls_hid_dim, domain_num)
    return p


def reference_forward(x, p):
    """Pure-JAX reference matching the PyTorch forward."""
    h = jnp.tanh(x @ p["fw1"] + p["fb1"])
    feat = jax.nn.sigmoid(h @ p["fw2"] + p["fb2"])
    l = jnp.tanh(feat @ p["lw1"] + p["lb1"])
    l = jnp.tanh(l @ p["lw2"] + p["lb2"])
    l = jax.nn.log_softmax(l @ p["lw3"] + p["lb3"], axis=-1)
    d = jnp.tanh(feat @ p["dw1"] + p["db1"])
    d = jnp.tanh(d @ p["dw2"] + p["db2"])
    d = jax.nn.log_softmax(d @ p["dw3"] + p["db3"], axis=-1)
    return l, d


if __name__ == "__main__":
    # Small, deliberately non-128-aligned shapes to exercise padding.
    B, in_dim, fea_hid, cls_hid, class_num = 60, 48, 32, 48, 10
    alpha = 1.0  # only affects backward via gradient reversal; unused in forward

    key = jax.random.PRNGKey(0)
    kx, kp = jax.random.split(key)
    x = jax.random.normal(kx, (B, in_dim), jnp.float32)
    params = init_params(kp, in_dim, fea_hid, cls_hid, class_num)

    wb, dims = pack_dann_params(params)
    label_pred, domain_pred = dann_forward(x, wb, dims)
    label_pred = jax.block_until_ready(label_pred)
    domain_pred = jax.block_until_ready(domain_pred)

    # Reference uses bf16-rounded weights (the kernel runs bf16 matmuls).
    p_bf = {k: v.astype(jnp.bfloat16).astype(jnp.float32) for k, v in params.items()}
    ref_l, ref_d = reference_forward(x, p_bf)

    assert label_pred.shape == (B, class_num)
    assert domain_pred.shape == (B, 2)
    assert jnp.allclose(label_pred, ref_l, atol=1e-1, rtol=1e-1)
    assert jnp.allclose(domain_pred, ref_d, atol=1e-1, rtol=1e-1)

    print("KERNEL_OK")
</pallas_src>

<mosaic_0001>
module attributes {stable_mosaic.version = 11 : i64} {
  func.func @kernel(%arg0: i32, %arg1: memref<32x48xf32, #tpu.memory_space<vmem>>, %arg2: memref<144x640xbf16, #tpu.memory_space<vmem>>, %arg3: memref<32x128xbf16, #tpu.memory_space<vmem>>) attributes {dimension_semantics = [#tpu.dimension_semantics<parallel>], iteration_bounds = array<i64: 2>, scalar_prefetch = 0 : i64, scratch_operands = 0 : i64, tpu.core_type = #tpu.core_type<tc>, window_params = [{transform_indices = @transform_0, window_bounds = array<i64: 32, 48>}, {pipeline_mode = #tpu.pipeline_mode<synchronous>, transform_indices = @transform_1, window_bounds = array<i64: 144, 640>}, {transform_indices = @transform_2, window_bounds = array<i64: 32, 128>}]} {
    %c0 = arith.constant 0 : index
    %c0_0 = arith.constant 0 : index
    %0 = vector.load %arg1[%c0, %c0_0] : memref<32x48xf32, #tpu.memory_space<vmem>>, vector<32x48xf32>
    %1 = arith.truncf %0 : vector<32x48xf32> to vector<32x48xbf16>
    %c0_1 = arith.constant 0 : index
    %c0_2 = arith.constant 0 : index
    %2 = vector.load %arg2[%c0_1, %c0_2] : memref<144x640xbf16, #tpu.memory_space<vmem>>, vector<48x128xbf16>
    %c128 = arith.constant 128 : index
    %c0_3 = arith.constant 0 : index
    %3 = vector.load %arg2[%c128, %c0_3] : memref<144x640xbf16, #tpu.memory_space<vmem>>, vector<1x128xbf16>
    %4 = arith.extf %3 : vector<1x128xbf16> to vector<1x128xf32>
    %cst = arith.constant dense<0.000000e+00> : vector<32x128xf32>
    %5 = tpu.matmul %1, %2, %cst {dimension_numbers = #tpu.dot_dimension_numbers<[1], [0], [0], [1], [0, 0, 1, 1], [], []>} : vector<32x48xbf16>, vector<48x128xbf16>, vector<32x128xf32> -> vector<32x128xf32>
    %6 = vector.broadcast %4 : vector<1x128xf32> to vector<32x128xf32>
    %7 = arith.addf %5, %6 : vector<32x128xf32>
    %8 = math.tanh %7 : vector<32x128xf32>
    %9 = arith.truncf %8 : vector<32x128xf32> to vector<32x128xbf16>
    %c0_4 = arith.constant 0 : index
    %c128_5 = arith.constant 128 : index
    %10 = vector.load %arg2[%c0_4, %c128_5] : memref<144x640xbf16, #tpu.memory_space<vmem>>, vector<128x128xbf16>
    %c128_6 = arith.constant 128 : index
    %c128_7 = arith.constant 128 : index
    %11 = vector.load %arg2[%c128_6, %c128_7] : memref<144x640xbf16, #tpu.memory_space<vmem>>, vector<1x128xbf16>
    %12 = arith.extf %11 : vector<1x128xbf16> to vector<1x128xf32>
    %cst_8 = arith.constant dense<0.000000e+00> : vector<32x128xf32>
    %13 = tpu.matmul %9, %10, %cst_8 {dimension_numbers = #tpu.dot_dimension_numbers<[1], [0], [0], [1], [0, 0, 1, 1], [], []>} : vector<32x128xbf16>, vector<128x128xbf16>, vector<32x128xf32> -> vector<32x128xf32>
    %14 = vector.broadcast %12 : vector<1x128xf32> to vector<32x128xf32>
    %15 = arith.addf %13, %14 : vector<32x128xf32>
    %cst_9 = arith.constant 5.000000e-01 : f32
    %16 = vector.broadcast %cst_9 : f32 to vector<32x128xf32>
    %17 = arith.mulf %16, %15 : vector<32x128xf32>
    %18 = math.tanh %17 : vector<32x128xf32>
    %cst_10 = arith.constant 1.000000e+00 : f32
    %19 = vector.broadcast %cst_10 : f32 to vector<32x128xf32>
    %20 = arith.addf %18, %19 : vector<32x128xf32>
    %cst_11 = arith.constant 5.000000e-01 : f32
    %21 = vector.broadcast %cst_11 : f32 to vector<32x128xf32>
    %22 = arith.mulf %21, %20 : vector<32x128xf32>
    %23 = arith.truncf %22 : vector<32x128xf32> to vector<32x128xbf16>
    %c0_12 = arith.constant 0 : index
    %c256 = arith.constant 256 : index
    %24 = vector.load %arg2[%c0_12, %c256] : memref<144x640xbf16, #tpu.memory_space<vmem>>, vector<128x128xbf16>
    %c128_13 = arith.constant 128 : index
    %c256_14 = arith.constant 256 : index
    %25 = vector.load %arg2[%c128_13, %c256_14] : memref<144x640xbf16, #tpu.memory_space<vmem>>, vector<1x128xbf16>
    %26 = arith.extf %25 : vector<1x128xbf16> to vector<1x128xf32>
    %cst_15 = arith.constant dense<0.000000e+00> : vector<32x128xf32>
    %27 = tpu.matmul %23, %24, %cst_15 {dimension_numbers = #tpu.dot_dimension_numbers<[1], [0], [0], [1], [0, 0, 1, 1], [], []>} : vector<32x128xbf16>, vector<128x128xbf16>, vector<32x128xf32> -> vector<32x128xf32>
    %28 = vector.broadcast %26 : vector<1x128xf32> to vector<32x128xf32>
    %29 = arith.addf %27, %28 : vector<32x128xf32>
    %30 = math.tanh %29 : vector<32x128xf32>
    %31 = arith.truncf %30 : vector<32x128xf32> to vector<32x128xbf16>
    %c0_16 = arith.constant 0 : index
    %c384 = arith.constant 384 : index
    %32 = vector.load %arg2[%c0_16, %c384] : memref<144x640xbf16, #tpu.memory_space<vmem>>, vector<128x128xbf16>
    %c128_17 = arith.constant 128 : index
    %c384_18 = arith.constant 384 : index
    %33 = vector.load %arg2[%c128_17, %c384_18] : memref<144x640xbf16, #tpu.memory_space<vmem>>, vector<1x128xbf16>
    %34 = arith.extf %33 : vector<1x128xbf16> to vector<1x128xf32>
    %cst_19 = arith.constant dense<0.000000e+00> : vector<32x128xf32>
    %35 = tpu.matmul %31, %32, %cst_19 {dimension_numbers = #tpu.dot_dimension_numbers<[1], [0], [0], [1], [0, 0, 1, 1], [], []>} : vector<32x128xbf16>, vector<128x128xbf16>, vector<32x128xf32> -> vector<32x128xf32>
    %36 = vector.broadcast %34 : vector<1x128xf32> to vector<32x128xf32>
    %37 = arith.addf %35, %36 : vector<32x128xf32>
    %38 = math.tanh %37 : vector<32x128xf32>
    %39 = arith.truncf %38 : vector<32x128xf32> to vector<32x128xbf16>
    %c0_20 = arith.constant 0 : index
    %c512 = arith.constant 512 : index
    %40 = vector.load %arg2[%c0_20, %c512] : memref<144x640xbf16, #tpu.memory_space<vmem>>, vector<128x128xbf16>
    %c128_21 = arith.constant 128 : index
    %c512_22 = arith.constant 512 : index
    %41 = vector.load %arg2[%c128_21, %c512_22] : memref<144x640xbf16, #tpu.memory_space<vmem>>, vector<1x128xbf16>
    %42 = arith.extf %41 : vector<1x128xbf16> to vector<1x128xf32>
    %cst_23 = arith.constant dense<0.000000e+00> : vector<32x128xf32>
    %43 = tpu.matmul %39, %40, %cst_23 {dimension_numbers = #tpu.dot_dimension_numbers<[1], [0], [0], [1], [0, 0, 1, 1], [], []>} : vector<32x128xbf16>, vector<128x128xbf16>, vector<32x128xf32> -> vector<32x128xf32>
    %44 = vector.broadcast %42 : vector<1x128xf32> to vector<32x128xf32>
    %45 = arith.addf %43, %44 : vector<32x128xf32>
    %46 = tpu.iota {dimensions = array<i32: 1>} : vector<32x128xi32>
    %c10_i32 = arith.constant 10 : i32
    %47 = vector.broadcast %c10_i32 : i32 to vector<32x128xi32>
    %48 = arith.cmpi slt, %46, %47 : vector<32x128xi32>
    %c10_i32_24 = arith.constant 10 : i32
    %49 = vector.broadcast %c10_i32_24 : i32 to vector<32x128xi32>
    %50 = arith.cmpi sge, %46, %49 : vector<32x128xi32>
    %c12_i32 = arith.constant 12 : i32
    %51 = vector.broadcast %c12_i32 : i32 to vector<32x128xi32>
    %52 = arith.cmpi slt, %46, %51 : vector<32x128xi32>
    %53 = arith.andi %50, %52 : vector<32x128xi1>
    %54 = arith.ori %48, %53 : vector<32x128xi1>
    %cst_25 = arith.constant -1.000000e+30 : f32
    %55 = vector.broadcast %cst_25 : f32 to vector<32x128xf32>
    %56 = arith.select %48, %45, %55 : vector<32x128xi1>, vector<32x128xf32>
    %cst_26 = arith.constant dense<0xFF800000> : vector<32xf32>
    %57 = vector.multi_reduction <maximumf>, %56, %cst_26 [1] : vector<32x128xf32> to vector<32xf32>
    %58 = vector.shape_cast %57 : vector<32xf32> to vector<32x1xf32>
    %cst_27 = arith.constant -1.000000e+30 : f32
    %59 = vector.broadcast %cst_27 : f32 to vector<32x128xf32>
    %60 = arith.select %53, %45, %59 : vector<32x128xi1>, vector<32x128xf32>
    %cst_28 = arith.constant dense<0xFF800000> : vector<32xf32>
    %61 = vector.multi_reduction <maximumf>, %60, %cst_28 [1] : vector<32x128xf32> to vector<32xf32>
    %62 = vector.shape_cast %61 : vector<32xf32> to vector<32x1xf32>
    %63 = vector.shape_cast %58 : vector<32x1xf32> to vector<32x1xf32>
    %64 = vector.broadcast %63 : vector<32x1xf32> to vector<32x128xf32>
    %65 = vector.shape_cast %62 : vector<32x1xf32> to vector<32x1xf32>
    %66 = vector.broadcast %65 : vector<32x1xf32> to vector<32x128xf32>
    %67 = arith.select %48, %64, %66 : vector<32x128xi1>, vector<32x128xf32>
    %68 = arith.subf %45, %67 : vector<32x128xf32>
    %cst_29 = arith.constant -1.000000e+30 : f32
    %69 = vector.broadcast %cst_29 : f32 to vector<32x128xf32>
    %70 = arith.select %54, %68, %69 : vector<32x128xi1>, vector<32x128xf32>
    %71 = math.exp %70 : vector<32x128xf32>
    %cst_30 = arith.constant 0.000000e+00 : f32
    %72 = vector.broadcast %cst_30 : f32 to vector<32x128xf32>
    %73 = arith.select %48, %71, %72 : vector<32x128xi1>, vector<32x128xf32>
    %cst_31 = arith.constant dense<0.000000e+00> : vector<32xf32>
    %74 = vector.multi_reduction <add>, %73, %cst_31 [1] : vector<32x128xf32> to vector<32xf32>
    %75 = vector.shape_cast %74 : vector<32xf32> to vector<32x1xf32>
    %cst_32 = arith.constant 0.000000e+00 : f32
    %76 = vector.broadcast %cst_32 : f32 to vector<32x128xf32>
    %77 = arith.select %53, %71, %76 : vector<32x128xi1>, vector<32x128xf32>
    %cst_33 = arith.constant dense<0.000000e+00> : vector<32xf32>
    %78 = vector.multi_reduction <add>, %77, %cst_33 [1] : vector<32x128xf32> to vector<32xf32>
    %79 = vector.shape_cast %78 : vector<32xf32> to vector<32x1xf32>
    %80 = math.log %75 : vector<32x1xf32>
    %81 = math.log %79 : vector<32x1xf32>
    %82 = vector.shape_cast %80 : vector<32x1xf32> to vector<32x1xf32>
    %83 = vector.broadcast %82 : vector<32x1xf32> to vector<32x128xf32>
    %84 = vector.shape_cast %81 : vector<32x1xf32> to vector<32x1xf32>
    %85 = vector.broadcast %84 : vector<32x1xf32> to vector<32x128xf32>
    %86 = arith.select %48, %83, %85 : vector<32x128xi1>, vector<32x128xf32>
    %87 = arith.subf %45, %67 : vector<32x128xf32>
    %88 = arith.subf %87, %86 : vector<32x128xf32>
    %cst_34 = arith.constant 0.000000e+00 : f32
    %89 = vector.broadcast %cst_34 : f32 to vector<32x128xf32>
    %90 = arith.select %54, %88, %89 : vector<32x128xi1>, vector<32x128xf32>
    %91 = arith.truncf %90 : vector<32x128xf32> to vector<32x128xbf16>
    %c0_35 = arith.constant 0 : index
    %c0_36 = arith.constant 0 : index
    %92 = vector.load %arg3[%c0_35, %c0_36] : memref<32x128xbf16, #tpu.memory_space<vmem>>, vector<32x128xbf16>
    tpu.vector_store %arg3[%c0_35, %c0_36], %91 {strides = array<i32>} : memref<32x128xbf16, #tpu.memory_space<vmem>>, vector<32x128xbf16>,
    return
  }
  func.func @transform_0(%arg0: i32) -> (i32, i32) {
    %c0_i32 = arith.constant 0 : i32
    %c0_i32_0 = arith.constant 0 : i32
    return %arg0, %c0_i32 : i32, i32
  }
  func.func @transform_1(%arg0: i32) -> (i32, i32) {
    %c0_i32 = arith.constant 0 : i32
    %c0_i32_0 = arith.constant 0 : i32
    %c0_i32_1 = arith.constant 0 : i32
    return %c0_i32, %c0_i32_0 : i32, i32
  }
  func.func @transform_2(%arg0: i32) -> (i32, i32) {
    %c0_i32 = arith.constant 0 : i32
    %c0_i32_0 = arith.constant 0 : i32
    return %arg0, %c0_i32 : i32, i32
  }
}

</mosaic_0001>

<llo_original>
// kernel: tpu_custom_call.1
$region0: #{tpu_custom_call.1}
  #allocation0 [shape = 'u32[]', space=smem, size = 0x4, offset = 0x4, fixed_abs, tag = 'smem constant byte address 0x4 - core index']
  #allocation1 [shape = 'u32[144,128]{1,0:T(1,128)}', space=vmem, size = 0x12000, scoped, tag = 'internal scratch']
  %s0 = inlined_call_operand.vmem [shape: f32[64,48], index: 0, kind: input, shape index: {}]
  %s1 = inlined_call_operand.hbm [shape: bf16[144,640], index: 1, kind: input, shape index: {}]
  %s2 = inlined_call_operand.hbm [shape: bf16[64,128], index: 2, kind: output, shape index: {}]
  %s3 = sld [smem:[#allocation0]]
  $region45: #{tpu_custom_call.1} parent=0
    _
  %s5 = ssub.s32 1, %s3
  %s6 = scalar_select 0, %s5, %s3
  $region1: #{tpu_custom_call.1} parent=0
    #allocation2 [shape = 'u8[184320]{0}', space=vmem, size = 0x2d000, scoped, tag = 'input window, operand 1, single buffered']
    #allocation3 [shape = 's32[2]{0}', space=sflag, size = 0x8, scoped, tag = 'scoped memory for tpu_custom_call.1']
    #allocation4 [shape = 's32[2]{0}', space=sflag, size = 0x8, scoped, tag = 'scoped memory for tpu_custom_call.1']
    #allocation5 [shape = 'u8[16384]{0}', space=vmem, size = 0x4000, scoped, tag = 'output window, operand 0']
    %7 = vsyncpa [#allocation3], 0
    %8 = vsyncpa [#allocation4], 0
    %s9 = scalar_lea.sflag [#allocation4], 1
    %10 = vsyncpa %s9, 0
    loop: start=0, step=1, limit=4
    $region2: #{tpu_custom_call.1} parent=1 // loop_pre_header
      _
    $region3: #{tpu_custom_call.1} parent=1 // loop_header
      %s12 = sphi 0, %s16
      %p13 = scmp.ge.s32.totalorder %s12, 4
      %s22 = sphi 0, %s24
      %s25 = sphi 0, %s22
      %s26 = sphi 0, %s25
      %s42 = sphi 0, %s26
      %s46 = sphi 0, %s46
      %s48 = sphi 0, %s46
      %s49 = sphi 0, %s48
      %s63 = sphi 0, %s49
      %s69 = sphi 0, %s71
      %s72 = sphi 0, %s69
      %s73 = sphi 0, %s72
      %s89 = sphi 0, %s73
    $region4: #{tpu_custom_call.1} parent=1 // loop_header_branch
      %15 = sbr.rel (%p13) target = $region8
    $region5: #{tpu_custom_call.1} parent=1 // loop_body
      %s17 = ssub.s32 %s12, 1
      %s18 = ssub.s32 %s12, 2
      %s19 = sadd.s32 %s12, 1
      %s20 = ssub.s32 %s12, %s19
      %p21 = scmp.eq.s32.totalorder %s20, 0
      %s23 = sadd.s32 %s22, 1
      %s24 = scalar_select %p21, %s22, %s23
      %p27 = pneg %p21
      %p28 = scmp.eq.s32.totalorder %s12, 1
      %p29 = por %p27, %p28
      %p30 = scmp.ne.s32.totalorder %s22, %s25
      %p31 = scmp.eq.s32.totalorder %s12, 0
      %p32 = por %p30, %p31
      %p33 = scmp.ne.s32.totalorder %s22, %s25
      %p34 = scmp.eq.s32.totalorder %s17, 1
      %p35 = por %p33, %p34
      %p36 = scmp.ne.s32.totalorder %s25, %s26
      %p37 = scmp.eq.s32.totalorder %s17, 0
      %p38 = por %p36, %p37
      %p39 = scmp.ne.s32.totalorder %s25, %s26
      %p40 = scmp.eq.s32.totalorder %s18, 1
      %p41 = por %p39, %p40
      %p43 = scmp.ne.s32.totalorder %s26, %s42
      %p44 = scmp.eq.s32.totalorder %s18, 0
      %p45 = por %p43, %p44
      %s47 = sadd.s32 %s46, 1
      %p50 = scmp.eq.s32.totalorder %s12, 1
      %p51 = scmp.ne.s32.totalorder %s46, %s48
      %p52 = scmp.eq.s32.totalorder %s12, 0
      %p53 = por %p51, %p52
      %p54 = scmp.ne.s32.totalorder %s46, %s48
      %p55 = scmp.eq.s32.totalorder %s17, 1
      %p56 = por %p54, %p55
      %p57 = scmp.ne.s32.totalorder %s48, %s49
      %p58 = scmp.eq.s32.totalorder %s17, 0
      %p59 = por %p57, %p58
      %p60 = scmp.ne.s32.totalorder %s48, %s49
      %p61 = scmp.eq.s32.totalorder %s18, 1
      %p62 = por %p60, %p61
      %p64 = scmp.ne.s32.totalorder %s49, %s63
      %p65 = scmp.eq.s32.totalorder %s18, 0
      %p66 = por %p64, %p65
      %s67 = ssub.s32 %s12, %s19
      %p68 = scmp.eq.s32.totalorder %s67, 0
      %s70 = sadd.s32 %s69, 1
      %s71 = scalar_select %p68, %s69, %s70
      %p74 = pneg %p68
      %p75 = scmp.eq.s32.totalorder %s12, 1
      %p76 = por %p74, %p75
      %p77 = scmp.ne.s32.totalorder %s69, %s72
      %p78 = scmp.eq.s32.totalorder %s12, 0
      %p79 = por %p77, %p78
      %p80 = scmp.ne.s32.totalorder %s69, %s72
      %p81 = scmp.eq.s32.totalorder %s17, 1
      %p82 = por %p80, %p81
      %p83 = scmp.ne.s32.totalorder %s72, %s73
      %p84 = scmp.eq.s32.totalorder %s17, 0
      %p85 = por %p83, %p84
      %p86 = scmp.ne.s32.totalorder %s72, %s73
      %p87 = scmp.eq.s32.totalorder %s18, 1
      %p88 = por %p86, %p87
      %p90 = scmp.ne.s32.totalorder %s73, %s89
      %p91 = scmp.eq.s32.totalorder %s18, 0
      %p92 = por %p90, %p91
      %p93 = scmp.le.s32.totalorder 1, %s12
      %p94 = scmp.lt.s32.totalorder %s12, 3
      %p95 = pnand %p93, %p94
      %p96 = pneg %p95
      // Predicated region
      $region9: #{tpu_custom_call.1} parent=5 // pred_check
        _
      $region10: #{tpu_custom_call.1} parent=5 // pred_check_branch
        %98 = sbr.rel (%p95) target = $region12
      $region11: #{tpu_custom_call.1} parent=5 // pred_region
        %s99 = ssub.s32 %s12, 1
        // Predicated region
        $region13: #{tpu_custom_call.1} parent=11 // pred_check
          %p100 = pneg %p59
        $region14: #{tpu_custom_call.1} parent=11 // pred_check_branch
          %102 = sbr.rel (%p100) target = $region16
        $region15: #{tpu_custom_call.1} parent=11 // pred_region
          %s104 = ssub.s32 5760, 5760
          %105 = vsyncadd [#allocation3], %s104
          %s106 = sshll.u32 [#allocation2], 4
          %s107 = int_to_ptr.vmem [resolvable:$true] %s106
          %112 = dma.hbm_to_vmem [thread:$0]  %s1, 5760, %s107, [#allocation3], 320, 320, 20
        $region16: #{tpu_custom_call.1} parent=11 // pred_fallthru
          _
      $region12: #{tpu_custom_call.1} parent=5 // pred_fallthru
        _
      %p113 = scmp.lt.s32.totalorder %s12, 2
      // Predicated region
      $region17: #{tpu_custom_call.1} parent=5 // pred_check
        %p114 = pneg %p113
      $region18: #{tpu_custom_call.1} parent=5 // pred_check_branch
        %116 = sbr.rel (%p114) target = $region20
      $region19: #{tpu_custom_call.1} parent=5 // pred_region
        // Predicated region
        $region21: #{tpu_custom_call.1} parent=19 // pred_check
          %p117 = pneg %p32
        $region22: #{tpu_custom_call.1} parent=19 // pred_check_branch
          %119 = sbr.rel (%p117) target = $region24
        $region23: #{tpu_custom_call.1} parent=19 // pred_region
          %s120 = smul.u32 4, %s12
          %p121 = scmp.lt.s32.totalorder %s120, 7
          %s122 = scalar_select %p121, %s120, 7
          %s123 = smul.addr %s122, 8
          %s124 = scalar_lea.vmem %s0, %s123
          %s125 = smul.u32 4, %s12
        $region24: #{tpu_custom_call.1} parent=19 // pred_fallthru
          _
      $region20: #{tpu_custom_call.1} parent=5 // pred_fallthru
        _
      %p126 = scmp.le.s32.totalorder 1, %s12
      %p127 = scmp.lt.s32.totalorder %s12, 3
      %p128 = pnand %p126, %p127
      %p129 = pneg %p128
      // Predicated region
      $region25: #{tpu_custom_call.1} parent=5 // pred_check
        _
      $region26: #{tpu_custom_call.1} parent=5 // pred_check_branch
        %131 = sbr.rel (%p128) target = $region28
      $region27: #{tpu_custom_call.1} parent=5 // pred_region
        %s132 = ssub.s32 %s12, 1
        // Predicated region
        $region29: #{tpu_custom_call.1} parent=27 // pred_check
          %p133 = pneg %p59
        $region30: #{tpu_custom_call.1} parent=27 // pred_check_branch
          %135 = sbr.rel (%p133) target = $region32
        $region31: #{tpu_custom_call.1} parent=27 // pred_region
          %136 = dma.done [#allocation3], 5760
        $region32: #{tpu_custom_call.1} parent=27 // pred_fallthru
          _
        %s137 = smul.u32 4, %s17
        %p138 = scmp.lt.s32.totalorder %s137, 7
        %s139 = scalar_select %p138, %s137, 7
        %s140 = smul.addr %s139, 8
        %s141 = scalar_lea.vmem %s0, %s140
        %p142 = pneg %p38
        %p143 = pneg %p35
        %p144 = pneg %p59
        %p145 = pneg %p56
        %p146 = pneg %p85
        %p147 = pneg %p82
        %s148 = sand.u32 %s72, 1
        %s149 = scalar_lea.sflag [#allocation4], %s148
        %s150 = sand.u32 %s72, 1
        %s151 = smul.addr %s150, 16
        %s152 = scalar_lea.vmem [#allocation5], %s151
        %s153 = smul.u32 4, %s17
        %p154 = scmp.lt.s32.totalorder %s153, 7
        %s155 = scalar_select %p154, %s153, 7
        %s156 = smul.addr %s155, 8
        %s157 = scalar_lea.vmem %s0, %s156
        %s158 = smul.u32 4, %s17
        %s159 = smul.u32 4, %s17
        %v161 = vld [vmem:[%s157] sm:$0xff]
        %v162 = vld [vmem:[%s157 + $0x8] sm:$0xff]
        %v163 = vld [vmem:[%s157 + $0x10] sm:$0xff]
        %v164 = vld [vmem:[%s157 + $0x18] sm:$0xff]
        %v165 = vpack.c.bf16 %v162, %v161
        %v166 = vpack.c.bf16 %v164, %v163
        %v167 = vld [vmem:[#allocation2] sm:$0xf]
        %v168 = vld [vmem:[#allocation2 + $0x14] sm:$0xf]
        %v169 = vld [vmem:[#allocation2 + $0x28] sm:$0xf]
        %v170 = vld [vmem:[#allocation2 + $0x3c] sm:$0xf]
        %v171 = vld [vmem:[#allocation2 + $0x50] sm:$0xf]
        %v172 = vld [vmem:[#allocation2 + $0x64] sm:$0xf]
        %v173 = vld [vmem:[#allocation2 + $0x140] sm:$0x1]
        %v174 = vunpack.c.l.bf16 %v173
        %v175 = vlaneseq
        %v176 = vshrl.u32 %v175, 7
        %v177 = vsub.s32 0, %v176
        %v178 = vrot.slane %v174, %v177
        %v185 = vunpack.c.l.b16 %v167
        %v186 = vunpack.c.l.b16 %v168
        %v187 = vunpack.c.l.b16 %v169
        %v188 = vunpack.c.l.b16 %v170
        %v189 = vunpack.c.l.b16 %v171
        %v190 = vunpack.c.l.b16 %v172
        %v191 = vpack.c.b16 %v186, %v185
        %v192 = vpack.c.b16 %v188, %v187
        %v193 = vpack.c.b16 %v190, %v189
        %vm197 = vcmask 392192
        %v199 = vsel %vm197, %v165, 0
        %v202 = vsel %vm197, %v166, 0
        %204 = vmatprep.subr.bf16.mxu0 0
        %205 = vmatpush1.bf16.msra.mxu0 %v191
        %206 = vmatprep.subr.bf16.mxu0 0
        %207 = vmatpush1.bf16.msra.mxu0 %v192
        %208 = vmatprep.subr.bf16.mxu0 0
        %209 = vmatpush1.bf16.msra.mxu0 %v193
        %210 = vmatprep.subr.bf16.mxu0 0
        %211 = vmatpush1.bf16.msra.mxu0 0
        %212 = vmatprep.subr.bf16.mxu0 0
        %213 = vmatpush1.bf16.msra.mxu0 0
        %214 = vmatprep.subr.bf16.mxu0 0
        %215 = vmatpush1.bf16.msra.mxu0 0
        %216 = vmatprep.subr.bf16.mxu0 0
        %217 = vmatpush1.bf16.msra.mxu0 0
        %218 = vmatprep.subr.bf16.mxu0 0
        %219 = vmatpush1.bf16.msra.mxu0 0
        %220 = vmatprep.subr.bf16.mxu0 0
        %221 = vmatpush1.bf16.msra.mxu0 0
        %222 = vmatprep.subr.bf16.mxu0 0
        %223 = vmatpush1.bf16.msra.mxu0 0
        %224 = vmatprep.subr.bf16.mxu0 0
        %225 = vmatpush1.bf16.msra.mxu0 0
        %226 = vmatprep.subr.bf16.mxu0 0
        %227 = vmatpush1.bf16.msra.mxu0 0
        %228 = vmatprep.subr.bf16.mxu0 0
        %229 = vmatpush1.bf16.msra.mxu0 0
        %230 = vmatprep.subr.bf16.mxu0 0
        %231 = vmatpush1.bf16.msra.mxu0 0
        %232 = vmatprep.subr.bf16.mxu0 0
        %233 = vmatpush1.bf16.msra.mxu0 0
        %234 = vmatprep.subr.bf16.mxu0 0
        %235 = vmatpush1.bf16.msra.mxu0 0
        %236 = vmatprep.mubr.bf16.mxu0 0
        %237 = vmatmul.mubr.bf16.gmra.mrb[0].mxu0 %v199
        %v238 = vpop.f32.mrb[0].mxu0
        %v239 = vadd.f32 %v178, %v238
        %v240 = vpop.f32.mrb[0].mxu0
        %v241 = vpop.f32.mrb[0].mxu0
        %v242 = vadd.f32 %v178, %v241
        %v243 = vpop.f32.mrb[0].mxu0
        %244 = vmatprep.mubr.bf16.mxu0 0
        %245 = vmatmul.mubr.bf16.gmra.mrb[0].mxu0 %v202
        %v246 = vpop.f32.mrb[0].mxu0
        %v247 = vadd.f32 %v178, %v246
        %v248 = vpop.f32.mrb[0].mxu0
        %v249 = vpop.f32.mrb[0].mxu0
        %v250 = vadd.f32 %v178, %v249
        %v251 = vpop.f32.mrb[0].mxu0
        %252 = vdwg.mxu0
        %v253 = vtanh.pop %v239
        %v254 = vtanh.pop %v242
        %v255 = vtanh.pop %v247
        %v256 = vtanh.pop %v250
        %v257 = vpack.c.bf16 %v254, %v253
        %v258 = vpack.c.bf16 %v256, %v255
        %v259 = vld [vmem:[#allocation2 + $0x4] sm:$0xf]
        %v260 = vld [vmem:[#allocation2 + $0x18] sm:$0xf]
        %v261 = vld [vmem:[#allocation2 + $0x2c] sm:$0xf]
        %v262 = vld [vmem:[#allocation2 + $0x40] sm:$0xf]
        %v263 = vld [vmem:[#allocation2 + $0x54] sm:$0xf]
        %v264 = vld [vmem:[#allocation2 + $0x68] sm:$0xf]
        %v265 = vld [vmem:[#allocation2 + $0x7c] sm:$0xf]
        %v266 = vld [vmem:[#allocation2 + $0x90] sm:$0xf]
        %v267 = vld [vmem:[#allocation2 + $0xa4] sm:$0xf]
        %v268 = vld [vmem:[#allocation2 + $0xb8] sm:$0xf]
        %v269 = vld [vmem:[#allocation2 + $0xcc] sm:$0xf]
        %v270 = vld [vmem:[#allocation2 + $0xe0] sm:$0xf]
        %v271 = vld [vmem:[#allocation2 + $0xf4] sm:$0xf]
        %v272 = vld [vmem:[#allocation2 + $0x108] sm:$0xf]
        %v273 = vld [vmem:[#allocation2 + $0x11c] sm:$0xf]
        %v274 = vld [vmem:[#allocation2 + $0x130] sm:$0xf]
        %v275 = vld [vmem:[#allocation2 + $0x144] sm:$0x1]
        %v276 = vunpack.c.l.bf16 %v275
        %v277 = vlaneseq
        %v278 = vshrl.u32 %v277, 7
        %v279 = vsub.s32 0, %v278
        %v280 = vrot.slane %v276, %v279
        %v297 = vunpack.c.l.b16 %v259
        %v298 = vunpack.c.l.b16 %v260
        %v299 = vunpack.c.l.b16 %v261
        %v300 = vunpack.c.l.b16 %v262
        %v301 = vunpack.c.l.b16 %v263
        %v302 = vunpack.c.l.b16 %v264
        %v303 = vunpack.c.l.b16 %v265
        %v304 = vunpack.c.l.b16 %v266
        %v305 = vunpack.c.l.b16 %v267
        %v306 = vunpack.c.l.b16 %v268
        %v307 = vunpack.c.l.b16 %v269
        %v308 = vunpack.c.l.b16 %v270
        %v309 = vunpack.c.l.b16 %v271
        %v310 = vunpack.c.l.b16 %v272
        %v311 = vunpack.c.l.b16 %v273
        %v312 = vunpack.c.l.b16 %v274
        %v313 = vpack.c.b16 %v298, %v297
        %v314 = vpack.c.b16 %v300, %v299
        %v315 = vpack.c.b16 %v302, %v301
        %v316 = vpack.c.b16 %v304, %v303
        %v317 = vpack.c.b16 %v306, %v305
        %v318 = vpack.c.b16 %v308, %v307
        %v319 = vpack.c.b16 %v310, %v309
        %v320 = vpack.c.b16 %v312, %v311
        %329 = vmatprep.subr.bf16.mxu0 0
        %330 = vmatpush1.bf16.msra.mxu0 %v313
        %331 = vmatprep.subr.bf16.mxu0 0
        %332 = vmatpush1.bf16.msra.mxu0 %v314
        %333 = vmatprep.subr.bf16.mxu0 0
        %334 = vmatpush1.bf16.msra.mxu0 %v315
        %335 = vmatprep.subr.bf16.mxu0 0
        %336 = vmatpush1.bf16.msra.mxu0 %v316
        %337 = vmatprep.subr.bf16.mxu0 0
        %338 = vmatpush1.bf16.msra.mxu0 %v317
        %339 = vmatprep.subr.bf16.mxu0 0
        %340 = vmatpush1.bf16.msra.mxu0 %v318
        %341 = vmatprep.subr.bf16.mxu0 0
        %342 = vmatpush1.bf16.msra.mxu0 %v319
        %343 = vmatprep.subr.bf16.mxu0 0
        %344 = vmatpush1.bf16.msra.mxu0 %v320
        %345 = vmatprep.subr.bf16.mxu0 0
        %346 = vmatpush1.bf16.msra.mxu0 0
        %347 = vmatprep.subr.bf16.mxu0 0
        %348 = vmatpush1.bf16.msra.mxu0 0
        %349 = vmatprep.subr.bf16.mxu0 0
        %350 = vmatpush1.bf16.msra.mxu0 0
        %351 = vmatprep.subr.bf16.mxu0 0
        %352 = vmatpush1.bf16.msra.mxu0 0
        %353 = vmatprep.subr.bf16.mxu0 0
        %354 = vmatpush1.bf16.msra.mxu0 0
        %355 = vmatprep.subr.bf16.mxu0 0
        %356 = vmatpush1.bf16.msra.mxu0 0
        %357 = vmatprep.subr.bf16.mxu0 0
        %358 = vmatpush1.bf16.msra.mxu0 0
        %359 = vmatprep.subr.bf16.mxu0 0
        %360 = vmatpush1.bf16.msra.mxu0 0
        %361 = vmatprep.mubr.bf16.mxu0 0
        %362 = vmatmul.mubr.bf16.gmra.mrb[0].mxu0 %v257
        %v363 = vpop.f32.mrb[0].mxu0
        %v364 = vadd.f32 %v280, %v363
        %v365 = vpop.f32.mrb[0].mxu0
        %v366 = vpop.f32.mrb[0].mxu0
        %v367 = vadd.f32 %v280, %v366
        %v368 = vpop.f32.mrb[0].mxu0
        %369 = vmatprep.mubr.bf16.mxu0 0
        %370 = vmatmul.mubr.bf16.gmra.mrb[0].mxu0 %v258
        %v371 = vpop.f32.mrb[0].mxu0
        %v372 = vadd.f32 %v280, %v371
        %v373 = vpop.f32.mrb[0].mxu0
        %v374 = vpop.f32.mrb[0].mxu0
        %v375 = vadd.f32 %v280, %v374
        %v376 = vpop.f32.mrb[0].mxu0
        %377 = vdwg.mxu0
        %v378 = vmul.f32 %v364, 0.5
        %v379 = vmul.f32 %v367, 0.5
        %v380 = vmul.f32 %v372, 0.5
        %v381 = vmul.f32 %v375, 0.5
        %v382 = vtanh.pop %v378
        %v383 = vtanh.pop %v379
        %v384 = vtanh.pop %v380
        %v385 = vtanh.pop %v381
        %v386 = vadd.f32 %v382, 1.0
        %v387 = vadd.f32 %v383, 1.0
        %v388 = vadd.f32 %v384, 1.0
        %v389 = vadd.f32 %v385, 1.0
        %v390 = vmul.f32 %v386, 0.5
        %v391 = vmul.f32 %v387, 0.5
        %v392 = vmul.f32 %v388, 0.5
        %v393 = vmul.f32 %v389, 0.5
        %v394 = vpack.c.bf16 %v391, %v390
        %v395 = vpack.c.bf16 %v393, %v392
        %v396 = vld [vmem:[#allocation2 + $0x8] sm:$0xf]
        %v397 = vld [vmem:[#allocation2 + $0x1c] sm:$0xf]
        %v398 = vld [vmem:[#allocation2 + $0x30] sm:$0xf]
        %v399 = vld [vmem:[#allocation2 + $0x44] sm:$0xf]
        %v400 = vld [vmem:[#allocation2 + $0x58] sm:$0xf]
        %v401 = vld [vmem:[#allocation2 + $0x6c] sm:$0xf]
        %v402 = vld [vmem:[#allocation2 + $0x80] sm:$0xf]
        %v403 = vld [vmem:[#allocation2 + $0x94] sm:$0xf]
        %v404 = vld [vmem:[#allocation2 + $0xa8] sm:$0xf]
        %v405 = vld [vmem:[#allocation2 + $0xbc] sm:$0xf]
        %v406 = vld [vmem:[#allocation2 + $0xd0] sm:$0xf]
        %v407 = vld [vmem:[#allocation2 + $0xe4] sm:$0xf]
        %v408 = vld [vmem:[#allocation2 + $0xf8] sm:$0xf]
        %v409 = vld [vmem:[#allocation2 + $0x10c] sm:$0xf]
        %v410 = vld [vmem:[#allocation2 + $0x120] sm:$0xf]
        %v411 = vld [vmem:[#allocation2 + $0x134] sm:$0xf]
        %v412 = vld [vmem:[#allocation2 + $0x148] sm:$0x1]
        %v413 = vunpack.c.l.bf16 %v412
        %v414 = vlaneseq
        %v415 = vshrl.u32 %v414, 7
        %v416 = vsub.s32 0, %v415
        %v417 = vrot.slane %v413, %v416
        %v434 = vunpack.c.l.b16 %v396
        %v435 = vunpack.c.l.b16 %v397
        %v436 = vunpack.c.l.b16 %v398
        %v437 = vunpack.c.l.b16 %v399
        %v438 = vunpack.c.l.b16 %v400
        %v439 = vunpack.c.l.b16 %v401
        %v440 = vunpack.c.l.b16 %v402
        %v441 = vunpack.c.l.b16 %v403
        %v442 = vunpack.c.l.b16 %v404
        %v443 = vunpack.c.l.b16 %v405
        %v444 = vunpack.c.l.b16 %v406
        %v445 = vunpack.c.l.b16 %v407
        %v446 = vunpack.c.l.b16 %v408
        %v447 = vunpack.c.l.b16 %v409
        %v448 = vunpack.c.l.b16 %v410
        %v449 = vunpack.c.l.b16 %v411
        %v450 = vpack.c.b16 %v435, %v434
        %v451 = vpack.c.b16 %v437, %v436
        %v452 = vpack.c.b16 %v439, %v438
        %v453 = vpack.c.b16 %v441, %v440
        %v454 = vpack.c.b16 %v443, %v442
        %v455 = vpack.c.b16 %v445, %v444
        %v456 = vpack.c.b16 %v447, %v446
        %v457 = vpack.c.b16 %v449, %v448
        %466 = vmatprep.subr.bf16.mxu0 0
        %467 = vmatpush1.bf16.msra.mxu0 %v450
        %468 = vmatprep.subr.bf16.mxu0 0
        %469 = vmatpush1.bf16.msra.mxu0 %v451
        %470 = vmatprep.subr.bf16.mxu0 0
        %471 = vmatpush1.bf16.msra.mxu0 %v452
        %472 = vmatprep.subr.bf16.mxu0 0
        %473 = vmatpush1.bf16.msra.mxu0 %v453
        %474 = vmatprep.subr.bf16.mxu0 0
        %475 = vmatpush1.bf16.msra.mxu0 %v454
        %476 = vmatprep.subr.bf16.mxu0 0
        %477 = vmatpush1.bf16.msra.mxu0 %v455
        %478 = vmatprep.subr.bf16.mxu0 0
        %479 = vmatpush1.bf16.msra.mxu0 %v456
        %480 = vmatprep.subr.bf16.mxu0 0
        %481 = vmatpush1.bf16.msra.mxu0 %v457
        %482 = vmatprep.subr.bf16.mxu0 0
        %483 = vmatpush1.bf16.msra.mxu0 0
        %484 = vmatprep.subr.bf16.mxu0 0
        %485 = vmatpush1.bf16.msra.mxu0 0
        %486 = vmatprep.subr.bf16.mxu0 0
        %487 = vmatpush1.bf16.msra.mxu0 0
        %488 = vmatprep.subr.bf16.mxu0 0
        %489 = vmatpush1.bf16.msra.mxu0 0
        %490 = vmatprep.subr.bf16.mxu0 0
        %491 = vmatpush1.bf16.msra.mxu0 0
        %492 = vmatprep.subr.bf16.mxu0 0
        %493 = vmatpush1.bf16.msra.mxu0 0
        %494 = vmatprep.subr.bf16.mxu0 0
        %495 = vmatpush1.bf16.msra.mxu0 0
        %496 = vmatprep.subr.bf16.mxu0 0
        %497 = vmatpush1.bf16.msra.mxu0 0
        %498 = vmatprep.mubr.bf16.mxu0 0
        %499 = vmatmul.mubr.bf16.gmra.mrb[0].mxu0 %v394
        %v500 = vpop.f32.mrb[0].mxu0
        %v501 = vadd.f32 %v417, %v500
        %v502 = vpop.f32.mrb[0].mxu0
        %v503 = vpop.f32.mrb[0].mxu0
        %v504 = vadd.f32 %v417, %v503
        %v505 = vpop.f32.mrb[0].mxu0
        %506 = vmatprep.mubr.bf16.mxu0 0
        %507 = vmatmul.mubr.bf16.gmra.mrb[0].mxu0 %v395
        %v508 = vpop.f32.mrb[0].mxu0
        %v509 = vadd.f32 %v417, %v508
        %v510 = vpop.f32.mrb[0].mxu0
        %v511 = vpop.f32.mrb[0].mxu0
        %v512 = vadd.f32 %v417, %v511
        %v513 = vpop.f32.mrb[0].mxu0
        %514 = vdwg.mxu0
        %v515 = vtanh.pop %v501
        %v516 = vtanh.pop %v504
        %v517 = vtanh.pop %v509
        %v518 = vtanh.pop %v512
        %v519 = vpack.c.bf16 %v516, %v515
        %v520 = vpack.c.bf16 %v518, %v517
        %v521 = vld [vmem:[#allocation2 + $0xc] sm:$0xf]
        %v522 = vld [vmem:[#allocation2 + $0x20] sm:$0xf]
        %v523 = vld [vmem:[#allocation2 + $0x34] sm:$0xf]
        %v524 = vld [vmem:[#allocation2 + $0x48] sm:$0xf]
        %v525 = vld [vmem:[#allocation2 + $0x5c] sm:$0xf]
        %v526 = vld [vmem:[#allocation2 + $0x70] sm:$0xf]
        %v527 = vld [vmem:[#allocation2 + $0x84] sm:$0xf]
        %v528 = vld [vmem:[#allocation2 + $0x98] sm:$0xf]
        %v529 = vld [vmem:[#allocation2 + $0xac] sm:$0xf]
        %v530 = vld [vmem:[#allocation2 + $0xc0] sm:$0xf]
        %v531 = vld [vmem:[#allocation2 + $0xd4] sm:$0xf]
        %v532 = vld [vmem:[#allocation2 + $0xe8] sm:$0xf]
        %v533 = vld [vmem:[#allocation2 + $0xfc] sm:$0xf]
        %v534 = vld [vmem:[#allocation2 + $0x110] sm:$0xf]
        %v535 = vld [vmem:[#allocation2 + $0x124] sm:$0xf]
        %v536 = vld [vmem:[#allocation2 + $0x138] sm:$0xf]
        %v537 = vld [vmem:[#allocation2 + $0x14c] sm:$0x1]
        %v538 = vunpack.c.l.bf16 %v537
        %v539 = vlaneseq
        %v540 = vshrl.u32 %v539, 7
        %v541 = vsub.s32 0, %v540
        %v542 = vrot.slane %v538, %v541
        %v559 = vunpack.c.l.b16 %v521
        %v560 = vunpack.c.l.b16 %v522
        %v561 = vunpack.c.l.b16 %v523
        %v562 = vunpack.c.l.b16 %v524
        %v563 = vunpack.c.l.b16 %v525
        %v564 = vunpack.c.l.b16 %v526
        %v565 = vunpack.c.l.b16 %v527
        %v566 = vunpack.c.l.b16 %v528
        %v567 = vunpack.c.l.b16 %v529
        %v568 = vunpack.c.l.b16 %v530
        %v569 = vunpack.c.l.b16 %v531
        %v570 = vunpack.c.l.b16 %v532
        %v571 = vunpack.c.l.b16 %v533
        %v572 = vunpack.c.l.b16 %v534
        %v573 = vunpack.c.l.b16 %v535
        %v574 = vunpack.c.l.b16 %v536
        %v575 = vpack.c.b16 %v560, %v559
        %v576 = vpack.c.b16 %v562, %v561
        %v577 = vpack.c.b16 %v564, %v563
        %v578 = vpack.c.b16 %v566, %v565
        %v579 = vpack.c.b16 %v568, %v567
        %v580 = vpack.c.b16 %v570, %v569
        %v581 = vpack.c.b16 %v572, %v571
        %v582 = vpack.c.b16 %v574, %v573
        %591 = vmatprep.subr.bf16.mxu0 0
        %592 = vmatpush1.bf16.msra.mxu0 %v575
        %593 = vmatprep.subr.bf16.mxu0 0
        %594 = vmatpush1.bf16.msra.mxu0 %v576
        %595 = vmatprep.subr.bf16.mxu0 0
        %596 = vmatpush1.bf16.msra.mxu0 %v577
        %597 = vmatprep.subr.bf16.mxu0 0
        %598 = vmatpush1.bf16.msra.mxu0 %v578
        %599 = vmatprep.subr.bf16.mxu0 0
        %600 = vmatpush1.bf16.msra.mxu0 %v579
        %601 = vmatprep.subr.bf16.mxu0 0
        %602 = vmatpush1.bf16.msra.mxu0 %v580
        %603 = vmatprep.subr.bf16.mxu0 0
        %604 = vmatpush1.bf16.msra.mxu0 %v581
        %605 = vmatprep.subr.bf16.mxu0 0
        %606 = vmatpush1.bf16.msra.mxu0 %v582
        %607 = vmatprep.subr.bf16.mxu0 0
        %608 = vmatpush1.bf16.msra.mxu0 0
        %609 = vmatprep.subr.bf16.mxu0 0
        %610 = vmatpush1.bf16.msra.mxu0 0
        %611 = vmatprep.subr.bf16.mxu0 0
        %612 = vmatpush1.bf16.msra.mxu0 0
        %613 = vmatprep.subr.bf16.mxu0 0
        %614 = vmatpush1.bf16.msra.mxu0 0
        %615 = vmatprep.subr.bf16.mxu0 0
        %616 = vmatpush1.bf16.msra.mxu0 0
        %617 = vmatprep.subr.bf16.mxu0 0
        %618 = vmatpush1.bf16.msra.mxu0 0
        %619 = vmatprep.subr.bf16.mxu0 0
        %620 = vmatpush1.bf16.msra.mxu0 0
        %621 = vmatprep.subr.bf16.mxu0 0
        %622 = vmatpush1.bf16.msra.mxu0 0
        %623 = vmatprep.mubr.bf16.mxu0 0
        %624 = vmatmul.mubr.bf16.gmra.mrb[0].mxu0 %v519
        %v625 = vpop.f32.mrb[0].mxu0
        %v626 = vadd.f32 %v542, %v625
        %v627 = vpop.f32.mrb[0].mxu0
        %v628 = vpop.f32.mrb[0].mxu0
        %v629 = vadd.f32 %v542, %v628
        %v630 = vpop.f32.mrb[0].mxu0
        %631 = vmatprep.mubr.bf16.mxu0 0
        %632 = vmatmul.mubr.bf16.gmra.mrb[0].mxu0 %v520
        %v633 = vpop.f32.mrb[0].mxu0
        %v634 = vadd.f32 %v542, %v633
        %v635 = vpop.f32.mrb[0].mxu0
        %v636 = vpop.f32.mrb[0].mxu0
        %v637 = vadd.f32 %v542, %v636
        %v638 = vpop.f32.mrb[0].mxu0
        %639 = vdwg.mxu0
        %v640 = vtanh.pop %v626
        %v641 = vtanh.pop %v629
        %v642 = vtanh.pop %v634
        %v643 = vtanh.pop %v637
        %v644 = vpack.c.bf16 %v641, %v640
        %v645 = vpack.c.bf16 %v643, %v642
        %v646 = vld [vmem:[#allocation2 + $0x10] sm:$0xf]
        %v647 = vld [vmem:[#allocation2 + $0x24] sm:$0xf]
        %v648 = vld [vmem:[#allocation2 + $0x38] sm:$0xf]
        %v649 = vld [vmem:[#allocation2 + $0x4c] sm:$0xf]
        %v650 = vld [vmem:[#allocation2 + $0x60] sm:$0xf]
        %v651 = vld [vmem:[#allocation2 + $0x74] sm:$0xf]
        %v652 = vld [vmem:[#allocation2 + $0x88] sm:$0xf]
        %v653 = vld [vmem:[#allocation2 + $0x9c] sm:$0xf]
        %v654 = vld [vmem:[#allocation2 + $0xb0] sm:$0xf]
        %v655 = vld [vmem:[#allocation2 + $0xc4] sm:$0xf]
        %v656 = vld [vmem:[#allocation2 + $0xd8] sm:$0xf]
        %v657 = vld [vmem:[#allocation2 + $0xec] sm:$0xf]
        %v658 = vld [vmem:[#allocation2 + $0x100] sm:$0xf]
        %v659 = vld [vmem:[#allocation2 + $0x114] sm:$0xf]
        %v660 = vld [vmem:[#allocation2 + $0x128] sm:$0xf]
        %v661 = vld [vmem:[#allocation2 + $0x13c] sm:$0xf]
        %v662 = vld [vmem:[#allocation2 + $0x150] sm:$0x1]
        %v663 = vunpack.c.l.bf16 %v662
        %v664 = vlaneseq
        %v665 = vshrl.u32 %v664, 7
        %v666 = vsub.s32 0, %v665
        %v667 = vrot.slane %v663, %v666
        %v684 = vunpack.c.l.b16 %v646
        %v685 = vunpack.c.l.b16 %v647
        %v686 = vunpack.c.l.b16 %v648
        %v687 = vunpack.c.l.b16 %v649
        %v688 = vunpack.c.l.b16 %v650
        %v689 = vunpack.c.l.b16 %v651
        %v690 = vunpack.c.l.b16 %v652
        %v691 = vunpack.c.l.b16 %v653
        %v692 = vunpack.c.l.b16 %v654
        %v693 = vunpack.c.l.b16 %v655
        %v694 = vunpack.c.l.b16 %v656
        %v695 = vunpack.c.l.b16 %v657
        %v696 = vunpack.c.l.b16 %v658
        %v697 = vunpack.c.l.b16 %v659
        %v698 = vunpack.c.l.b16 %v660
        %v699 = vunpack.c.l.b16 %v661
        %v700 = vpack.c.b16 %v685, %v684
        %v701 = vpack.c.b16 %v687, %v686
        %v702 = vpack.c.b16 %v689, %v688
        %v703 = vpack.c.b16 %v691, %v690
        %v704 = vpack.c.b16 %v693, %v692
        %v705 = vpack.c.b16 %v695, %v694
        %v706 = vpack.c.b16 %v697, %v696
        %v707 = vpack.c.b16 %v699, %v698
        %716 = vmatprep.subr.bf16.mxu0 0
        %717 = vmatpush1.bf16.msra.mxu0 %v700
        %718 = vmatprep.subr.bf16.mxu0 0
        %719 = vmatpush1.bf16.msra.mxu0 %v701
        %720 = vmatprep.subr.bf16.mxu0 0
        %721 = vmatpush1.bf16.msra.mxu0 %v702
        %722 = vmatprep.subr.bf16.mxu0 0
        %723 = vmatpush1.bf16.msra.mxu0 %v703
        %724 = vmatprep.subr.bf16.mxu0 0
        %725 = vmatpush1.bf16.msra.mxu0 %v704
        %726 = vmatprep.subr.bf16.mxu0 0
        %727 = vmatpush1.bf16.msra.mxu0 %v705
        %728 = vmatprep.subr.bf16.mxu0 0
        %729 = vmatpush1.bf16.msra.mxu0 %v706
        %730 = vmatprep.subr.bf16.mxu0 0
        %731 = vmatpush1.bf16.msra.mxu0 %v707
        %732 = vmatprep.subr.bf16.mxu0 0
        %733 = vmatpush1.bf16.msra.mxu0 0
        %734 = vmatprep.subr.bf16.mxu0 0
        %735 = vmatpush1.bf16.msra.mxu0 0
        %736 = vmatprep.subr.bf16.mxu0 0
        %737 = vmatpush1.bf16.msra.mxu0 0
        %738 = vmatprep.subr.bf16.mxu0 0
        %739 = vmatpush1.bf16.msra.mxu0 0
        %740 = vmatprep.subr.bf16.mxu0 0
        %741 = vmatpush1.bf16.msra.mxu0 0
        %742 = vmatprep.subr.bf16.mxu0 0
        %743 = vmatpush1.bf16.msra.mxu0 0
        %744 = vmatprep.subr.bf16.mxu0 0
        %745 = vmatpush1.bf16.msra.mxu0 0
        %746 = vmatprep.subr.bf16.mxu0 0
        %747 = vmatpush1.bf16.msra.mxu0 0
        %748 = vmatprep.mubr.bf16.mxu0 0
        %749 = vmatmul.mubr.bf16.gmra.mrb[0].mxu0 %v644
        %v750 = vpop.f32.mrb[0].mxu0
        %v751 = vadd.f32 %v667, %v750
        %v752 = vpop.f32.mrb[0].mxu0
        %v753 = vpop.f32.mrb[0].mxu0
        %v754 = vadd.f32 %v667, %v753
        %v755 = vpop.f32.mrb[0].mxu0
        %756 = vmatprep.mubr.bf16.mxu0 0
        %757 = vmatmul.mubr.bf16.gmra.mrb[0].mxu0 %v645
        %v758 = vpop.f32.mrb[0].mxu0
        %v759 = vadd.f32 %v667, %v758
        %v760 = vpop.f32.mrb[0].mxu0
        %v761 = vpop.f32.mrb[0].mxu0
        %v762 = vadd.f32 %v667, %v761
        %v763 = vpop.f32.mrb[0].mxu0
        %764 = vdwg.mxu0
        %v765 = vlaneseq
        %v766 = vand.u32 %v765, 127
        %vm767 = vcmp.lt.s32.totalorder %v766, 10
        %vm768 = vcmp.ge.s32.totalorder %v766, 10
        %vm769 = vcmp.lt.s32.totalorder %v766, 12
        %vm770 = vmand %vm768, %vm769
        %vm771 = vmor %vm767, %vm770
        %v772 = vsel %vm767, %v751, -1e+30
        %v773 = vsel %vm767, %v754, -1e+30
        %v774 = vsel %vm767, %v759, -1e+30
        %v775 = vsel %vm767, %v762, -1e+30
        %776 = vmax.xlane.f32.xlu0 %v772
        %v777 = vpop.xlane.xlu0 %776
        %778 = vmax.xlane.f32.xlu0 %v773
        %v779 = vpop.xlane.xlu0 %778
        %780 = vmax.xlane.f32.xlu0 %v774
        %v781 = vpop.xlane.xlu0 %780
        %782 = vmax.xlane.f32.xlu0 %v775
        %v783 = vpop.xlane.xlu0 %782
        %v784 = vsel %vm770, %v751, -1e+30
        %v785 = vsel %vm770, %v754, -1e+30
        %v786 = vsel %vm770, %v759, -1e+30
        %v787 = vsel %vm770, %v762, -1e+30
        %788 = vmax.xlane.f32.xlu0 %v784
        %v789 = vpop.xlane.xlu0 %788
        %790 = vmax.xlane.f32.xlu0 %v785
        %v791 = vpop.xlane.xlu0 %790
        %792 = vmax.xlane.f32.xlu0 %v786
        %v793 = vpop.xlane.xlu0 %792
        %794 = vmax.xlane.f32.xlu0 %v787
        %v795 = vpop.xlane.xlu0 %794
        %v796 = vsel %vm767, %v777, %v789
        %v797 = vsel %vm767, %v779, %v791
        %v798 = vsel %vm767, %v781, %v793
        %v799 = vsel %vm767, %v783, %v795
        %v800 = vsub.f32 %v751, %v796
        %v801 = vsub.f32 %v754, %v797
        %v802 = vsub.f32 %v759, %v798
        %v803 = vsub.f32 %v762, %v799
        %v804 = vsel %vm771, %v800, -1e+30
        %v805 = vsel %vm771, %v801, -1e+30
        %v806 = vsel %vm771, %v802, -1e+30
        %v807 = vsel %vm771, %v803, -1e+30
        %v808 = vmul.f32 %v804, 1.442695
        %v809 = vpow.pop %v808
        %v810 = vmul.f32 %v805, 1.442695
        %v811 = vpow.pop %v810
        %v812 = vmul.f32 %v806, 1.442695
        %v813 = vpow.pop %v812
        %v814 = vmul.f32 %v807, 1.442695
        %v815 = vpow.pop %v814
        %v816 = vsel %vm767, %v809, 0.0
        %v817 = vsel %vm767, %v811, 0.0
        %v818 = vsel %vm767, %v813, 0.0
        %v819 = vsel %vm767, %v815, 0.0
        %820 = vadd.xlane.f32.xlu0 %v816
        %v821 = vpop.xlane.xlu0 %820
        %822 = vadd.xlane.f32.xlu0 %v817
        %v823 = vpop.xlane.xlu0 %822
        %824 = vadd.xlane.f32.xlu0 %v818
        %v825 = vpop.xlane.xlu0 %824
        %826 = vadd.xlane.f32.xlu0 %v819
        %v827 = vpop.xlane.xlu0 %826
        %v828 = vsel %vm770, %v809, 0.0
        %v829 = vsel %vm770, %v811, 0.0
        %v830 = vsel %vm770, %v813, 0.0
        %v831 = vsel %vm770, %v815, 0.0
        %832 = vadd.xlane.f32.xlu0 %v828
        %v833 = vpop.xlane.xlu0 %832
        %834 = vadd.xlane.f32.xlu0 %v829
        %v835 = vpop.xlane.xlu0 %834
        %836 = vadd.xlane.f32.xlu0 %v830
        %v837 = vpop.xlane.xlu0 %836
        %838 = vadd.xlane.f32.xlu0 %v831
        %v839 = vpop.xlane.xlu0 %838
        %v840 = vlog2.pop %v821
        %v841 = vmul.f32 %v840, 0.6931472
        %v842 = vlog2.pop %v823
        %v843 = vmul.f32 %v842, 0.6931472
        %v844 = vlog2.pop %v825
        %v845 = vmul.f32 %v844, 0.6931472
        %v846 = vlog2.pop %v827
        %v847 = vmul.f32 %v846, 0.6931472
        %v848 = vlog2.pop %v833
        %v849 = vmul.f32 %v848, 0.6931472
        %v850 = vlog2.pop %v835
        %v851 = vmul.f32 %v850, 0.6931472
        %v852 = vlog2.pop %v837
        %v853 = vmul.f32 %v852, 0.6931472
        %v854 = vlog2.pop %v839
        %v855 = vmul.f32 %v854, 0.6931472
        %v856 = vsel %vm767, %v841, %v849
        %v857 = vsel %vm767, %v843, %v851
        %v858 = vsel %vm767, %v845, %v853
        %v859 = vsel %vm767, %v847, %v855
        %v860 = vsub.f32 %v800, %v856
        %v861 = vsub.f32 %v801, %v857
        %v862 = vsub.f32 %v802, %v858
        %v863 = vsub.f32 %v803, %v859
        %v864 = vsel %vm771, %v860, 0.0
        %v865 = vsel %vm771, %v861, 0.0
        %v866 = vsel %vm771, %v862, 0.0
        %v867 = vsel %vm771, %v863, 0.0
        %v868 = vpack.c.bf16 %v865, %v864
        %v869 = vpack.c.bf16 %v867, %v866
        %v872 = vunpack.c.l.b16 %v868
        %v873 = vunpack.c.h.b16 %v868
        %v874 = vunpack.c.l.b16 %v869
        %v875 = vunpack.c.h.b16 %v869
        %v876 = vpack.c.b16 %v872, %v872
        %v877 = vpack.c.b16 %v873, %v873
        %v878 = vpack.c.b16 %v874, %v874
        %v879 = vpack.c.b16 %v875, %v875
        %884 = vst [vmem:[%s152] sm:$0xf] %v876
        %885 = vst [vmem:[%s152 + $0x4] sm:$0xf] %v877
        %886 = vst [vmem:[%s152 + $0x8] sm:$0xf] %v878
        %887 = vst [vmem:[%s152 + $0xc] sm:$0xf] %v879
        %s888 = sand.u32 %s72, 1
        %s889 = scalar_lea.sflag [#allocation4], %s888
        %s890 = sand.u32 %s72, 1
        %s891 = smul.addr %s890, 16
        %s892 = scalar_lea.vmem [#allocation5], %s891
        // Predicated region
        $region33: #{tpu_custom_call.1} parent=27 // pred_check
          %p893 = pneg %p82
        $region34: #{tpu_custom_call.1} parent=27 // pred_check_branch
          %895 = sbr.rel (%p893) target = $region36
        $region35: #{tpu_custom_call.1} parent=27 // pred_region
          %s896 = smul.u32 4, %s17
          %s898 = ssub.s32 256, 256
          %899 = vsyncadd %s889, %s898
          %s900 = smul.addr %s896, 64
          %s901 = scalar_lea.hbm %s2, %s900
          %s902 = sshll.u32 %s892, 4
          %s903 = int_to_ptr.vmem [resolvable:$true] %s902
          %908 = dma.vmem_to_hbm [thread:$0]  %s903, 256, %s901, %s889, 64, 64, 4
        $region36: #{tpu_custom_call.1} parent=27 // pred_fallthru
          _
      $region28: #{tpu_custom_call.1} parent=5 // pred_fallthru
        _
      %p909 = scmp.le.s32.totalorder 2, %s12
      // Predicated region
      $region37: #{tpu_custom_call.1} parent=5 // pred_check
        %p910 = pneg %p909
      $region38: #{tpu_custom_call.1} parent=5 // pred_check_branch
        %912 = sbr.rel (%p910) target = $region40
      $region39: #{tpu_custom_call.1} parent=5 // pred_region
        %s913 = ssub.s32 %s12, 2
        // Predicated region
        $region41: #{tpu_custom_call.1} parent=39 // pred_check
          %p914 = pneg %p88
        $region42: #{tpu_custom_call.1} parent=39 // pred_check_branch
          %916 = sbr.rel (%p914) target = $region44
        $region43: #{tpu_custom_call.1} parent=39 // pred_region
          %s917 = sand.u32 %s73, 1
          %s918 = scalar_lea.sflag [#allocation4], %s917
          %s919 = sand.u32 %s73, 1
          %s920 = smul.addr %s919, 16
          %s921 = scalar_lea.vmem [#allocation5], %s920
          %922 = dma.done %s918, 256
        $region44: #{tpu_custom_call.1} parent=39 // pred_fallthru
          _
      $region40: #{tpu_custom_call.1} parent=5 // pred_fallthru
        _
    $region6: #{tpu_custom_call.1} parent=1 // loop_footer
      %s16 = sadd.s32 1, %s12
    $region7: #{tpu_custom_call.1} parent=1 // loop_footer_branch
      %11 = sbr.rel target = $region3
    $region8: #{tpu_custom_call.1} parent=1 // loop_exit
      _
    %923 = vsyncpa [#allocation3], 1
    %s924 = scalar_lea.sflag [#allocation3], 1
    %925 = vsyncpa %s924, 1
    %926 = vsyncpa [#allocation4], 1
    %s927 = scalar_lea.sflag [#allocation4], 1
    %928 = vsyncpa %s927, 1

</llo_original>
